<compile_context>
chip_gen: v6e
topology: v6e:2x2x1
jax: 0.10.0
libtpu: 0.0.40
codegen_flags: <defaults>
</compile_context>

<pallas_src>
import functools
import math

import jax
import jax.numpy as jnp
from jax.experimental import pallas as pl
from jax.experimental.pallas import tpu as pltpu

_NEG_INF = -1e30  # bias padding for lanes beyond nc (kills them in log_softmax)


def _round_up(x, m):
    return (x + m - 1) // m * m


def _classifier_kernel(x_ref, w1_ref, b1_ref, w2_ref, b2_ref,
                       logits_ref, logsm_ref, *, nc, n_rows, tm):
    """Fused: Linear1(+folded BN) -> ReLU -> Linear2 -> log_softmax."""
    x = x_ref[...]                                                # (tm, din)

    # Zero-fill rows beyond the real row count (only emitted when the last
    # block is partial) so the throwaway rows never compute on garbage.
    if n_rows % tm != 0:
        row = jax.lax.broadcasted_iota(jnp.int32, x.shape, 0) + pl.program_id(0) * tm
        x = jnp.where(row < n_rows, x, 0.0)

    h = jnp.dot(x, w1_ref[...], preferred_element_type=jnp.float32) + b1_ref[...]
    h = jnp.maximum(h, 0.0)                                       # (tm, H)

    # Second matmul uses a lane-dense (nc_p = 128) N tile in VMEM; padded lanes
    # carry ~-1e30 bias so they vanish under exp.  Only the real nc lanes are
    # written back to HBM.
    logits = jnp.dot(h, w2_ref[...], preferred_element_type=jnp.float32) + b2_ref[...]
    m = jnp.max(logits, axis=-1, keepdims=True)
    e = jnp.exp(logits - m)
    lse = m + jnp.log(jnp.sum(e, axis=-1, keepdims=True))

    logits_ref[...] = logits[:, :nc]
    logsm_ref[...] = (logits - lse)[:, :nc]


def classifier_forward(x, params, *, tm=512, eps=1e-5):
    """Classifier.forward: accepts (B, F, P, 2*nz) or (B, F, 2*nz) input.

    Returns (logits, log_softmax) with the same leading dims and last dim nc.
    """
    # TODO(synk): training-mode BatchNorm1d (batch statistics + running-stat
    # update) not implemented; this is the eval/inference forward with BN
    # folded exactly into the first Linear.
    w1, b1, gamma, beta, rmean, rvar, w2, b2 = params
    lead = x.shape[:-1]
    din = x.shape[-1]
    hdim = w1.shape[0]
    nc = w2.shape[0]

    xf = x.reshape(-1, din).astype(jnp.float32)
    n = xf.shape[0]

    # Fold eval-mode BatchNorm1d into the first linear (exact):
    #   BN(xW1^T + b1) = (xW1^T + b1 - mean) * s + beta,  s = gamma/sqrt(var+eps)
    s = gamma / jnp.sqrt(rvar + eps)
    w1f = (w1 * s[:, None]).astype(jnp.float32)
    b1f = ((b1 - rmean) * s + beta).astype(jnp.float32)

    # Resident operands (tiny; constant index_map keeps them in VMEM).
    nc_p = _round_up(max(nc, 128), 128)
    w1t = w1f.T                                                   # (din, H), no pad
    b1p = b1f.reshape(1, hdim)
    w2t = jnp.zeros((hdim, nc_p), jnp.float32).at[:, :nc].set(w2.T)
    b2p = jnp.full((1, nc_p), _NEG_INF, jnp.float32).at[0, :nc].set(b2)

    # Row tile: big to amortize per-step overhead, but keep >= 2 grid steps so
    # v7x's two TensorCores both get work ("parallel" grid axis).
    tm = max(8, min(tm, _round_up(-(-n // 2), 8)))
    grid = (pl.cdiv(n, tm),)

    flops = 2 * n * (din * hdim + hdim * nc_p)
    bytes_accessed = 4 * (n * din + 2 * n * nc            # x read, two outputs
                          + din * hdim + hdim * nc_p + hdim + nc_p)  # weights/bias
    cost = pl.CostEstimate(flops=flops,
                           transcendentals=n * (nc_p + 1),
                           bytes_accessed=bytes_accessed)

    kernel = functools.partial(_classifier_kernel, nc=nc, n_rows=n, tm=tm)
    logits_f, logsm_f = pl.pallas_call(
        kernel,
        out_shape=(jax.ShapeDtypeStruct((n, nc), jnp.float32),
                   jax.ShapeDtypeStruct((n, nc), jnp.float32)),
        grid=grid,
        in_specs=[
            pl.BlockSpec((tm, din), lambda i: (i, 0)),      # x tile (unpadded)
            pl.BlockSpec((din, hdim), lambda i: (0, 0)),    # W1^T (BN-folded, resident)
            pl.BlockSpec((1, hdim), lambda i: (0, 0)),      # b1   (resident)
            pl.BlockSpec((hdim, nc_p), lambda i: (0, 0)),   # W2^T (lane-padded, resident)
            pl.BlockSpec((1, nc_p), lambda i: (0, 0)),      # b2   (resident)
        ],
        out_specs=[
            pl.BlockSpec((tm, nc), lambda i: (i, 0)),       # logits, unpadded
            pl.BlockSpec((tm, nc), lambda i: (i, 0)),       # log_softmax, unpadded
        ],
        compiler_params=pltpu.CompilerParams(
            dimension_semantics=("parallel",),   # rows split over TCs (v7x)
            vmem_limit_bytes=32 << 20,           # safe on v7x's 64 MiB VMEM too
        ),
        cost_estimate=cost,
    )(xf, w1t, b1p, w2t, b2p)

    return logits_f.reshape(*lead, nc), logsm_f.reshape(*lead, nc)


def classifier_reference(x, params, eps=1e-5):
    """Pure-JAX reference (eval-mode BatchNorm) for correctness checking."""
    w1, b1, gamma, beta, rmean, rvar, w2, b2 = params
    lead = x.shape[:-1]
    nc = w2.shape[0]
    xf = x.reshape(-1, x.shape[-1])
    h = xf @ w1.T + b1
    h = (h - rmean) / jnp.sqrt(rvar + eps) * gamma + beta
    h = jnp.maximum(h, 0.0)
    logits = h @ w2.T + b2
    logsm = jax.nn.log_softmax(logits, axis=-1)
    return logits.reshape(*lead, nc), logsm.reshape(*lead, nc)


def init_classifier_params(key, nz, nc, hidden=256):
    """Deterministic init mimicking nn.Linear defaults + non-trivial BN stats."""
    din = 2 * nz
    k = jax.random.split(key, 8)
    b1_bound = 1.0 / math.sqrt(din)
    b2_bound = 1.0 / math.sqrt(hidden)
    w1 = jax.random.uniform(k[0], (hidden, din), jnp.float32, -b1_bound, b1_bound)
    b1 = jax.random.uniform(k[1], (hidden,), jnp.float32, -b1_bound, b1_bound)
    gamma = jax.random.uniform(k[2], (hidden,), jnp.float32, 0.5, 1.5)
    beta = jax.random.normal(k[3], (hidden,), jnp.float32) * 0.1
    rmean = jax.random.normal(k[4], (hidden,), jnp.float32) * 0.1
    rvar = jax.random.uniform(k[5], (hidden,), jnp.float32, 0.5, 1.5)
    w2 = jax.random.uniform(k[6], (nc, hidden), jnp.float32, -b2_bound, b2_bound)
    b2 = jax.random.uniform(k[7], (nc,), jnp.float32, -b2_bound, b2_bound)
    return (w1, b1, gamma, beta, rmean, rvar, w2, b2)


if __name__ == "__main__":
    key = jax.random.PRNGKey(0)
    nz, nc = 16, 2                      # -> fc input dim 2*nz = 32
    batch, frame, n_particle = 2, 3, 4

    key, kx, kp = jax.random.split(key, 3)
    params = init_classifier_params(kp, nz, nc)

    # 4-D input path: (batch, frame, n_particle, 2*nz)
    x4 = jax.random.normal(kx, (batch, frame, n_particle, 2 * nz), jnp.float32)
    logits4, logsm4 = classifier_forward(x4, params)
    logits4, logsm4 = jax.block_until_ready((logits4, logsm4))
    ref_l4, ref_s4 = classifier_reference(x4, params)
    assert logits4.shape == (batch, frame, n_particle, nc)
    assert logsm4.shape == (batch, frame, n_particle, nc)
    assert jnp.allclose(logits4, ref_l4, atol=1e-4, rtol=1e-4), "logits mismatch (4D)"
    assert jnp.allclose(logsm4, ref_s4, atol=1e-4, rtol=1e-4), "log_softmax mismatch (4D)"

    # 3-D input path: (batch, frame, 2*nz)
    x3 = jax.random.normal(jax.random.PRNGKey(1), (batch, frame, 2 * nz), jnp.float32)
    logits3, logsm3 = classifier_forward(x3, params)
    logits3, logsm3 = jax.block_until_ready((logits3, logsm3))
    ref_l3, ref_s3 = classifier_reference(x3, params)
    assert logits3.shape == (batch, frame, nc)
    assert jnp.allclose(logits3, ref_l3, atol=1e-4, rtol=1e-4), "logits mismatch (3D)"
    assert jnp.allclose(logsm3, ref_s3, atol=1e-4, rtol=1e-4), "log_softmax mismatch (3D)"

    # Larger batch exercising the multi-step ("parallel") grid + partial tail.
    xl = jax.random.normal(jax.random.PRNGKey(2), (7, 11, 13, 2 * nz), jnp.float32)
    ll, sl = jax.block_until_ready(classifier_forward(xl, params))
    rl, rs = classifier_reference(xl, params)
    assert jnp.allclose(ll, rl, atol=1e-4, rtol=1e-4), "logits mismatch (large)"
    assert jnp.allclose(sl, rs, atol=1e-4, rtol=1e-4), "log_softmax mismatch (large)"

    print("KERNEL_OK")
</pallas_src>

<mosaic_0001>
module attributes {stable_mosaic.version = 11 : i64} {
  func.func @_classifier_kernel(%arg0: i32, %arg1: memref<16x32xf32, #tpu.memory_space<vmem>>, %arg2: memref<32x256xf32, #tpu.memory_space<vmem>>, %arg3: memref<1x256xf32, #tpu.memory_space<vmem>>, %arg4: memref<256x128xf32, #tpu.memory_space<vmem>>, %arg5: memref<1x128xf32, #tpu.memory_space<vmem>>, %arg6: memref<16x2xf32, #tpu.memory_space<vmem>>, %arg7: memref<16x2xf32, #tpu.memory_space<vmem>>) attributes {dimension_semantics = [#tpu.dimension_semantics<parallel>], iteration_bounds = array<i64: 2>, scalar_prefetch = 0 : i64, scratch_operands = 0 : i64, tpu.core_type = #tpu.core_type<tc>, window_params = [{transform_indices = @transform_0, window_bounds = array<i64: 16, 32>}, {pipeline_mode = #tpu.pipeline_mode<synchronous>, transform_indices = @transform_1, window_bounds = array<i64: 32, 256>}, {pipeline_mode = #tpu.pipeline_mode<synchronous>, transform_indices = @transform_2, window_bounds = array<i64: 1, 256>}, {pipeline_mode = #tpu.pipeline_mode<synchronous>, transform_indices = @transform_3, window_bounds = array<i64: 256, 128>}, {pipeline_mode = #tpu.pipeline_mode<synchronous>, transform_indices = @transform_4, window_bounds = array<i64: 1, 128>}, {transform_indices = @transform_5, window_bounds = array<i64: 16, 2>}, {transform_indices = @transform_6, window_bounds = array<i64: 16, 2>}]} {
    %c0 = arith.constant 0 : index
    %c0_0 = arith.constant 0 : index
    %0 = vector.load %arg1[%c0, %c0_0] : memref<16x32xf32, #tpu.memory_space<vmem>>, vector<16x32xf32>
    %1 = tpu.iota {dimensions = array<i32: 0>} : vector<16x32xi32>
    %c16_i32 = arith.constant 16 : i32
    %2 = arith.muli %arg0, %c16_i32 : i32
    %3 = vector.broadcast %2 : i32 to vector<16x32xi32>
    %4 = arith.addi %1, %3 : vector<16x32xi32>
    %c24_i32 = arith.constant 24 : i32
    %5 = vector.broadcast %c24_i32 : i32 to vector<16x32xi32>
    %6 = arith.cmpi slt, %4, %5 : vector<16x32xi32>
    %cst = arith.constant 0.000000e+00 : f32
    %7 = vector.broadcast %cst : f32 to vector<16x32xf32>
    %8 = arith.select %6, %0, %7 : vector<16x32xi1>, vector<16x32xf32>
    %c0_1 = arith.constant 0 : index
    %c0_2 = arith.constant 0 : index
    %9 = vector.load %arg2[%c0_1, %c0_2] : memref<32x256xf32, #tpu.memory_space<vmem>>, vector<32x256xf32>
    %cst_3 = arith.constant dense<0.000000e+00> : vector<16x256xf32>
    %10 = tpu.matmul %8, %9, %cst_3 {dimension_numbers = #tpu.dot_dimension_numbers<[1], [0], [0], [1], [0, 0, 1, 1], [], []>} : vector<16x32xf32>, vector<32x256xf32>, vector<16x256xf32> -> vector<16x256xf32>
    %c0_4 = arith.constant 0 : index
    %c0_5 = arith.constant 0 : index
    %11 = vector.load %arg3[%c0_4, %c0_5] : memref<1x256xf32, #tpu.memory_space<vmem>>, vector<1x256xf32>
    %12 = vector.broadcast %11 : vector<1x256xf32> to vector<16x256xf32>
    %13 = arith.addf %10, %12 : vector<16x256xf32>
    %cst_6 = arith.constant 0.000000e+00 : f32
    %14 = vector.broadcast %cst_6 : f32 to vector<16x256xf32>
    %15 = arith.maximumf %13, %14 : vector<16x256xf32>
    %c0_7 = arith.constant 0 : index
    %c0_8 = arith.constant 0 : index
    %16 = vector.load %arg4[%c0_7, %c0_8] : memref<256x128xf32, #tpu.memory_space<vmem>>, vector<256x128xf32>
    %cst_9 = arith.constant dense<0.000000e+00> : vector<16x128xf32>
    %17 = tpu.matmul %15, %16, %cst_9 {dimension_numbers = #tpu.dot_dimension_numbers<[1], [0], [0], [1], [0, 0, 1, 1], [], []>} : vector<16x256xf32>, vector<256x128xf32>, vector<16x128xf32> -> vector<16x128xf32>
    %c0_10 = arith.constant 0 : index
    %c0_11 = arith.constant 0 : index
    %18 = vector.load %arg5[%c0_10, %c0_11] : memref<1x128xf32, #tpu.memory_space<vmem>>, vector<1x128xf32>
    %19 = vector.broadcast %18 : vector<1x128xf32> to vector<16x128xf32>
    %20 = arith.addf %17, %19 : vector<16x128xf32>
    %cst_12 = arith.constant dense<0xFF800000> : vector<16xf32>
    %21 = vector.multi_reduction <maximumf>, %20, %cst_12 [1] : vector<16x128xf32> to vector<16xf32>
    %22 = vector.shape_cast %21 : vector<16xf32> to vector<16x1xf32>
    %23 = vector.broadcast %22 : vector<16x1xf32> to vector<16x128xf32>
    %24 = arith.subf %20, %23 : vector<16x128xf32>
    %25 = math.exp %24 : vector<16x128xf32>
    %cst_13 = arith.constant dense<0.000000e+00> : vector<16xf32>
    %26 = vector.multi_reduction <add>, %25, %cst_13 [1] : vector<16x128xf32> to vector<16xf32>
    %27 = vector.shape_cast %26 : vector<16xf32> to vector<16x1xf32>
    %28 = math.log %27 : vector<16x1xf32>
    %29 = arith.addf %22, %28 : vector<16x1xf32>
    %30 = vector.extract_strided_slice %20 {offsets = [0, 0], sizes = [16, 2], strides = [1, 1]} : vector<16x128xf32> to vector<16x2xf32>
    %c0_14 = arith.constant 0 : index
    %c0_15 = arith.constant 0 : index
    %31 = vector.load %arg6[%c0_14, %c0_15] : memref<16x2xf32, #tpu.memory_space<vmem>>, vector<16x2xf32>
    tpu.vector_store %arg6[%c0_14, %c0_15], %30 {strides = array<i32>} : memref<16x2xf32, #tpu.memory_space<vmem>>, vector<16x2xf32>,
    %32 = vector.broadcast %29 : vector<16x1xf32> to vector<16x128xf32>
    %33 = arith.subf %20, %32 : vector<16x128xf32>
    %34 = vector.extract_strided_slice %33 {offsets = [0, 0], sizes = [16, 2], strides = [1, 1]} : vector<16x128xf32> to vector<16x2xf32>
    %c0_16 = arith.constant 0 : index
    %c0_17 = arith.constant 0 : index
    %35 = vector.load %arg7[%c0_16, %c0_17] : memref<16x2xf32, #tpu.memory_space<vmem>>, vector<16x2xf32>
    tpu.vector_store %arg7[%c0_16, %c0_17], %34 {strides = array<i32>} : memref<16x2xf32, #tpu.memory_space<vmem>>, vector<16x2xf32>,
    return
  }
  func.func @transform_0(%arg0: i32) -> (i32, i32) {
    %c0_i32 = arith.constant 0 : i32
    %c0_i32_0 = arith.constant 0 : i32
    return %arg0, %c0_i32 : i32, i32
  }
  func.func @transform_1(%arg0: i32) -> (i32, i32) {
    %c0_i32 = arith.constant 0 : i32
    %c0_i32_0 = arith.constant 0 : i32
    %c0_i32_1 = arith.constant 0 : i32
    return %c0_i32, %c0_i32_0 : i32, i32
  }
  func.func @transform_2(%arg0: i32) -> (i32, i32) {
    %c0_i32 = arith.constant 0 : i32
    %c0_i32_0 = arith.constant 0 : i32
    %c0_i32_1 = arith.constant 0 : i32
    return %c0_i32, %c0_i32_0 : i32, i32
  }
  func.func @transform_3(%arg0: i32) -> (i32, i32) {
    %c0_i32 = arith.constant 0 : i32
    %c0_i32_0 = arith.constant 0 : i32
    %c0_i32_1 = arith.constant 0 : i32
    return %c0_i32, %c0_i32_0 : i32, i32
  }
  func.func @transform_4(%arg0: i32) -> (i32, i32) {
    %c0_i32 = arith.constant 0 : i32
    %c0_i32_0 = arith.constant 0 : i32
    %c0_i32_1 = arith.constant 0 : i32
    return %c0_i32, %c0_i32_0 : i32, i32
  }
  func.func @transform_5(%arg0: i32) -> (i32, i32) {
    %c0_i32 = arith.constant 0 : i32
    %c0_i32_0 = arith.constant 0 : i32
    return %arg0, %c0_i32 : i32, i32
  }
  func.func @transform_6(%arg0: i32) -> (i32, i32) {
    %c0_i32 = arith.constant 0 : i32
    %c0_i32_0 = arith.constant 0 : i32
    return %arg0, %c0_i32 : i32, i32
  }
}

</mosaic_0001>

<llo_original>
// kernel: tpu_custom_call.1
$region0: #{tpu_custom_call.1}
  #allocation0 [shape = 'u32[]', space=smem, size = 0x4, offset = 0x4, fixed_abs, tag = 'smem constant byte address 0x4 - core index']
  #allocation1 [shape = 'u32[144,128]{1,0:T(1,128)}', space=vmem, size = 0x12000, scoped, tag = 'internal scratch']
  %s0 = inlined_call_operand.hbm [shape: f32[24,32], index: 0, kind: input, shape index: {}]
  %s1 = inlined_call_operand.hbm [shape: f32[32,256], index: 1, kind: input, shape index: {}]
  %s2 = inlined_call_operand.vmem [shape: f32[1,256], index: 2, kind: input, shape index: {}]
  %s3 = inlined_call_operand.hbm [shape: f32[256,128], index: 3, kind: input, shape index: {}]
  %s4 = inlined_call_operand.vmem [shape: f32[1,128], index: 4, kind: input, shape index: {}]
  %s5 = inlined_call_operand.vmem [shape: f32[24,2], index: 5, kind: output, shape index: {0}]
  %s6 = inlined_call_operand.vmem [shape: f32[24,2], index: 6, kind: output, shape index: {1}]
  %7 = xla_tuple %s5, %s6
  %s8 = sld [smem:[#allocation0]]
  $region169: #{tpu_custom_call.1} parent=0
    _
  %s10 = ssub.s32 1, %s8
  %s11 = scalar_select 0, %s10, %s8
  $region1: #{tpu_custom_call.1} parent=0
    #allocation2 [shape = 'u8[16384]{0}', space=vmem, size = 0x4000, scoped, tag = 'input window, operand 0']
    #allocation3 [shape = 's32[2]{0}', space=sflag, size = 0x8, scoped, tag = 'scoped memory for tpu_custom_call.1']
    #allocation4 [shape = 'u8[32768]{0}', space=vmem, size = 0x8000, scoped, tag = 'input window, operand 1, single buffered']
    #allocation5 [shape = 's32[1]{0}', space=sflag, size = 0x4, scoped, tag = 'scoped memory for tpu_custom_call.1']
    #allocation6 [shape = 'u8[131072]{0}', space=vmem, size = 0x20000, scoped, tag = 'input window, operand 3, single buffered']
    #allocation7 [shape = 'u8[16384]{0}', space=vmem, size = 0x4000, scoped, tag = 'output window, operand 0']
    #allocation8 [shape = 'u8[16384]{0}', space=vmem, size = 0x4000, scoped, tag = 'output window, operand 1']
    %12 = vsyncpa [#allocation3], 0
    %s13 = scalar_lea.sflag [#allocation3], 1
    %14 = vsyncpa %s13, 0
    %15 = vsyncpa [#allocation5], 0
    loop: start=0, step=1, limit=4
    $region2: #{tpu_custom_call.1} parent=1 // loop_pre_header
      _
    $region3: #{tpu_custom_call.1} parent=1 // loop_header
      %s17 = sphi 0, %s21
      %p18 = scmp.ge.s32.totalorder %s17, 4
      %s27 = sphi 0, %s29
      %s30 = sphi 0, %s27
      %s31 = sphi 0, %s30
      %s47 = sphi 0, %s31
      %s51 = sphi 0, %s51
      %s53 = sphi 0, %s51
      %s54 = sphi 0, %s53
      %s68 = sphi 0, %s54
      %s72 = sphi 0, %s72
      %s74 = sphi 0, %s72
      %s75 = sphi 0, %s74
      %s89 = sphi 0, %s75
      %s93 = sphi 0, %s93
      %s95 = sphi 0, %s93
      %s96 = sphi 0, %s95
      %s110 = sphi 0, %s96
      %s114 = sphi 0, %s114
      %s116 = sphi 0, %s114
      %s117 = sphi 0, %s116
      %s131 = sphi 0, %s117
      %s137 = sphi 0, %s139
      %s140 = sphi 0, %s137
      %s141 = sphi 0, %s140
      %s157 = sphi 0, %s141
      %s163 = sphi 0, %s165
      %s166 = sphi 0, %s163
      %s167 = sphi 0, %s166
      %s183 = sphi 0, %s167
    $region4: #{tpu_custom_call.1} parent=1 // loop_header_branch
      %20 = sbr.rel (%p18) target = $region8
    $region5: #{tpu_custom_call.1} parent=1 // loop_body
      %s22 = ssub.s32 %s17, 1
      %s23 = ssub.s32 %s17, 2
      %s24 = sadd.s32 %s17, 1
      %s25 = ssub.s32 %s17, %s24
      %p26 = scmp.eq.s32.totalorder %s25, 0
      %s28 = sadd.s32 %s27, 1
      %s29 = scalar_select %p26, %s27, %s28
      %p32 = pneg %p26
      %p33 = scmp.eq.s32.totalorder %s17, 1
      %p34 = por %p32, %p33
      %p35 = scmp.ne.s32.totalorder %s27, %s30
      %p36 = scmp.eq.s32.totalorder %s17, 0
      %p37 = por %p35, %p36
      %p38 = scmp.ne.s32.totalorder %s27, %s30
      %p39 = scmp.eq.s32.totalorder %s22, 1
      %p40 = por %p38, %p39
      %p41 = scmp.ne.s32.totalorder %s30, %s31
      %p42 = scmp.eq.s32.totalorder %s22, 0
      %p43 = por %p41, %p42
      %p44 = scmp.ne.s32.totalorder %s30, %s31
      %p45 = scmp.eq.s32.totalorder %s23, 1
      %p46 = por %p44, %p45
      %p48 = scmp.ne.s32.totalorder %s31, %s47
      %p49 = scmp.eq.s32.totalorder %s23, 0
      %p50 = por %p48, %p49
      %s52 = sadd.s32 %s51, 1
      %p55 = scmp.eq.s32.totalorder %s17, 1
      %p56 = scmp.ne.s32.totalorder %s51, %s53
      %p57 = scmp.eq.s32.totalorder %s17, 0
      %p58 = por %p56, %p57
      %p59 = scmp.ne.s32.totalorder %s51, %s53
      %p60 = scmp.eq.s32.totalorder %s22, 1
      %p61 = por %p59, %p60
      %p62 = scmp.ne.s32.totalorder %s53, %s54
      %p63 = scmp.eq.s32.totalorder %s22, 0
      %p64 = por %p62, %p63
      %p65 = scmp.ne.s32.totalorder %s53, %s54
      %p66 = scmp.eq.s32.totalorder %s23, 1
      %p67 = por %p65, %p66
      %p69 = scmp.ne.s32.totalorder %s54, %s68
      %p70 = scmp.eq.s32.totalorder %s23, 0
      %p71 = por %p69, %p70
      %s73 = sadd.s32 %s72, 1
      %p76 = scmp.eq.s32.totalorder %s17, 1
      %p77 = scmp.ne.s32.totalorder %s72, %s74
      %p78 = scmp.eq.s32.totalorder %s17, 0
      %p79 = por %p77, %p78
      %p80 = scmp.ne.s32.totalorder %s72, %s74
      %p81 = scmp.eq.s32.totalorder %s22, 1
      %p82 = por %p80, %p81
      %p83 = scmp.ne.s32.totalorder %s74, %s75
      %p84 = scmp.eq.s32.totalorder %s22, 0
      %p85 = por %p83, %p84
      %p86 = scmp.ne.s32.totalorder %s74, %s75
      %p87 = scmp.eq.s32.totalorder %s23, 1
      %p88 = por %p86, %p87
      %p90 = scmp.ne.s32.totalorder %s75, %s89
      %p91 = scmp.eq.s32.totalorder %s23, 0
      %p92 = por %p90, %p91
      %s94 = sadd.s32 %s93, 1
      %p97 = scmp.eq.s32.totalorder %s17, 1
      %p98 = scmp.ne.s32.totalorder %s93, %s95
      %p99 = scmp.eq.s32.totalorder %s17, 0
      %p100 = por %p98, %p99
      %p101 = scmp.ne.s32.totalorder %s93, %s95
      %p102 = scmp.eq.s32.totalorder %s22, 1
      %p103 = por %p101, %p102
      %p104 = scmp.ne.s32.totalorder %s95, %s96
      %p105 = scmp.eq.s32.totalorder %s22, 0
      %p106 = por %p104, %p105
      %p107 = scmp.ne.s32.totalorder %s95, %s96
      %p108 = scmp.eq.s32.totalorder %s23, 1
      %p109 = por %p107, %p108
      %p111 = scmp.ne.s32.totalorder %s96, %s110
      %p112 = scmp.eq.s32.totalorder %s23, 0
      %p113 = por %p111, %p112
      %s115 = sadd.s32 %s114, 1
      %p118 = scmp.eq.s32.totalorder %s17, 1
      %p119 = scmp.ne.s32.totalorder %s114, %s116
      %p120 = scmp.eq.s32.totalorder %s17, 0
      %p121 = por %p119, %p120
      %p122 = scmp.ne.s32.totalorder %s114, %s116
      %p123 = scmp.eq.s32.totalorder %s22, 1
      %p124 = por %p122, %p123
      %p125 = scmp.ne.s32.totalorder %s116, %s117
      %p126 = scmp.eq.s32.totalorder %s22, 0
      %p127 = por %p125, %p126
      %p128 = scmp.ne.s32.totalorder %s116, %s117
      %p129 = scmp.eq.s32.totalorder %s23, 1
      %p130 = por %p128, %p129
      %p132 = scmp.ne.s32.totalorder %s117, %s131
      %p133 = scmp.eq.s32.totalorder %s23, 0
      %p134 = por %p132, %p133
      %s135 = ssub.s32 %s17, %s24
      %p136 = scmp.eq.s32.totalorder %s135, 0
      %s138 = sadd.s32 %s137, 1
      %s139 = scalar_select %p136, %s137, %s138
      %p142 = pneg %p136
      %p143 = scmp.eq.s32.totalorder %s17, 1
      %p144 = por %p142, %p143
      %p145 = scmp.ne.s32.totalorder %s137, %s140
      %p146 = scmp.eq.s32.totalorder %s17, 0
      %p147 = por %p145, %p146
      %p148 = scmp.ne.s32.totalorder %s137, %s140
      %p149 = scmp.eq.s32.totalorder %s22, 1
      %p150 = por %p148, %p149
      %p151 = scmp.ne.s32.totalorder %s140, %s141
      %p152 = scmp.eq.s32.totalorder %s22, 0
      %p153 = por %p151, %p152
      %p154 = scmp.ne.s32.totalorder %s140, %s141
      %p155 = scmp.eq.s32.totalorder %s23, 1
      %p156 = por %p154, %p155
      %p158 = scmp.ne.s32.totalorder %s141, %s157
      %p159 = scmp.eq.s32.totalorder %s23, 0
      %p160 = por %p158, %p159
      %s161 = ssub.s32 %s17, %s24
      %p162 = scmp.eq.s32.totalorder %s161, 0
      %s164 = sadd.s32 %s163, 1
      %s165 = scalar_select %p162, %s163, %s164
      %p168 = pneg %p162
      %p169 = scmp.eq.s32.totalorder %s17, 1
      %p170 = por %p168, %p169
      %p171 = scmp.ne.s32.totalorder %s163, %s166
      %p172 = scmp.eq.s32.totalorder %s17, 0
      %p173 = por %p171, %p172
      %p174 = scmp.ne.s32.totalorder %s163, %s166
      %p175 = scmp.eq.s32.totalorder %s22, 1
      %p176 = por %p174, %p175
      %p177 = scmp.ne.s32.totalorder %s166, %s167
      %p178 = scmp.eq.s32.totalorder %s22, 0
      %p179 = por %p177, %p178
      %p180 = scmp.ne.s32.totalorder %s166, %s167
      %p181 = scmp.eq.s32.totalorder %s23, 1
      %p182 = por %p180, %p181
      %p184 = scmp.ne.s32.totalorder %s167, %s183
      %p185 = scmp.eq.s32.totalorder %s23, 0
      %p186 = por %p184, %p185
      %p187 = scmp.le.s32.totalorder 1, %s17
      %p188 = scmp.lt.s32.totalorder %s17, 3
      %p189 = pnand %p187, %p188
      %p190 = pneg %p189
      // Predicated region
      $region9: #{tpu_custom_call.1} parent=5 // pred_check
        _
      $region10: #{tpu_custom_call.1} parent=5 // pred_check_branch
        %192 = sbr.rel (%p189) target = $region12
      $region11: #{tpu_custom_call.1} parent=5 // pred_region
        %s193 = ssub.s32 %s17, 1
        // Predicated region
        $region13: #{tpu_custom_call.1} parent=11 // pred_check
          %p194 = pneg %p64
        $region14: #{tpu_custom_call.1} parent=11 // pred_check_branch
          %196 = sbr.rel (%p194) target = $region16
        $region15: #{tpu_custom_call.1} parent=11 // pred_region
          %s198 = ssub.s32 1024, 1024
          %199 = vsyncadd [#allocation5], %s198
          %s200 = sshll.u32 [#allocation4], 4
          %s201 = int_to_ptr.vmem [resolvable:$true] %s200
          %206 = dma.hbm_to_vmem [thread:$0]  %s1, 1024, %s201, [#allocation5], 256, 256, 16
        $region16: #{tpu_custom_call.1} parent=11 // pred_fallthru
          _
        // Predicated region
        $region17: #{tpu_custom_call.1} parent=11 // pred_check
          %p207 = pneg %p85
        $region18: #{tpu_custom_call.1} parent=11 // pred_check_branch
          %209 = sbr.rel (%p207) target = $region20
        $region19: #{tpu_custom_call.1} parent=11 // pred_region
          _
        $region20: #{tpu_custom_call.1} parent=11 // pred_fallthru
          _
        // Predicated region
        $region21: #{tpu_custom_call.1} parent=11 // pred_check
          %p210 = pneg %p106
        $region22: #{tpu_custom_call.1} parent=11 // pred_check_branch
          %212 = sbr.rel (%p210) target = $region24
        $region23: #{tpu_custom_call.1} parent=11 // pred_region
          %s214 = ssub.s32 4096, 4096
          %215 = vsyncadd [#allocation5], %s214
          %s216 = sshll.u32 [#allocation6], 4
          %s217 = int_to_ptr.vmem [resolvable:$true] %s216
          %222 = dma.hbm_to_vmem [thread:$0]  %s3, 4096, %s217, [#allocation5], 128, 128, 8
        $region24: #{tpu_custom_call.1} parent=11 // pred_fallthru
          _
        // Predicated region
        $region25: #{tpu_custom_call.1} parent=11 // pred_check
          %p223 = pneg %p127
        $region26: #{tpu_custom_call.1} parent=11 // pred_check_branch
          %225 = sbr.rel (%p223) target = $region28
        $region27: #{tpu_custom_call.1} parent=11 // pred_region
          _
        $region28: #{tpu_custom_call.1} parent=11 // pred_fallthru
          _
      $region12: #{tpu_custom_call.1} parent=5 // pred_fallthru
        _
      %p226 = scmp.lt.s32.totalorder %s17, 2
      // Predicated region
      $region29: #{tpu_custom_call.1} parent=5 // pred_check
        %p227 = pneg %p226
      $region30: #{tpu_custom_call.1} parent=5 // pred_check_branch
        %229 = sbr.rel (%p227) target = $region32
      $region31: #{tpu_custom_call.1} parent=5 // pred_region
        // Predicated region
        $region33: #{tpu_custom_call.1} parent=31 // pred_check
          %p230 = pneg %p37
        $region34: #{tpu_custom_call.1} parent=31 // pred_check_branch
          %232 = sbr.rel (%p230) target = $region36
        $region35: #{tpu_custom_call.1} parent=31 // pred_region
          %s233 = sand.u32 %s27, 1
          %s234 = scalar_lea.sflag [#allocation3], %s233
          %s235 = sand.u32 %s27, 1
          %s236 = smul.addr %s235, 16
          %s237 = scalar_lea.vmem [#allocation2], %s236
          %s238 = smul.u32 2, %s17
          %s239 = ssub.s32 3, %s238
          %p240 = scmp.lt.s32.totalorder %s239, 2
          %s241 = scalar_select %p240, %s239, 2
          %s242 = smul.u32 128, %s241
          %s244 = ssub.s32 256, %s242
          %245 = vsyncadd %s234, %s244
          %p246 = scmp.ne.s32.totalorder 0, %s242
          %s247 = smul.addr %s238, 128
          %s248 = scalar_lea.hbm %s0, %s247
          %s249 = smul.u32 8, %s241
          %s250 = sshll.u32 %s237, 4
          %s251 = int_to_ptr.vmem [resolvable:$true] %s250
          %s252 = sshll.u32 %s249, 4
          %256 = dma.hbm_to_vmem [thread:$0]  (%p246), %s248, %s252, %s251, %s234, 128, 128, 8
        $region36: #{tpu_custom_call.1} parent=31 // pred_fallthru
          _
      $region32: #{tpu_custom_call.1} parent=5 // pred_fallthru
        _
      %p257 = scmp.le.s32.totalorder 1, %s17
      %p258 = scmp.lt.s32.totalorder %s17, 3
      %p259 = pnand %p257, %p258
      %p260 = pneg %p259
      // Predicated region
      $region37: #{tpu_custom_call.1} parent=5 // pred_check
        _
      $region38: #{tpu_custom_call.1} parent=5 // pred_check_branch
        %262 = sbr.rel (%p259) target = $region40
      $region39: #{tpu_custom_call.1} parent=5 // pred_region
        %s263 = ssub.s32 %s17, 1
        %s264 = sand.u32 %s30, 1
        %s265 = scalar_lea.sflag [#allocation3], %s264
        %s266 = sand.u32 %s30, 1
        %s267 = smul.addr %s266, 16
        %s268 = scalar_lea.vmem [#allocation2], %s267
        // Predicated region
        $region41: #{tpu_custom_call.1} parent=39 // pred_check
          %p269 = pneg %p43
        $region42: #{tpu_custom_call.1} parent=39 // pred_check_branch
          %271 = sbr.rel (%p269) target = $region44
        $region43: #{tpu_custom_call.1} parent=39 // pred_region
          %272 = dma.done %s265, 256
        $region44: #{tpu_custom_call.1} parent=39 // pred_fallthru
          _
        // Predicated region
        $region45: #{tpu_custom_call.1} parent=39 // pred_check
          %p273 = pneg %p64
        $region46: #{tpu_custom_call.1} parent=39 // pred_check_branch
          %275 = sbr.rel (%p273) target = $region48
        $region47: #{tpu_custom_call.1} parent=39 // pred_region
          %276 = dma.done [#allocation5], 1024
        $region48: #{tpu_custom_call.1} parent=39 // pred_fallthru
          _
        // Predicated region
        $region49: #{tpu_custom_call.1} parent=39 // pred_check
          %p277 = pneg %p106
        $region50: #{tpu_custom_call.1} parent=39 // pred_check_branch
          %279 = sbr.rel (%p277) target = $region52
        $region51: #{tpu_custom_call.1} parent=39 // pred_region
          %280 = dma.done [#allocation5], 4096
        $region52: #{tpu_custom_call.1} parent=39 // pred_fallthru
          _
        %s281 = sand.u32 %s30, 1
        %s282 = scalar_lea.sflag [#allocation3], %s281
        %s283 = sand.u32 %s30, 1
        %s284 = smul.addr %s283, 16
        %s285 = scalar_lea.vmem [#allocation2], %s284
        %p286 = pneg %p43
        %p287 = pneg %p40
        %p288 = pneg %p64
        %p289 = pneg %p61
        %p290 = pneg %p85
        %p291 = pneg %p82
        %p292 = pneg %p106
        %p293 = pneg %p103
        %p294 = pneg %p127
        %p295 = pneg %p124
        %p296 = pneg %p153
        %p297 = pneg %p150
        %s298 = sand.u32 %s140, 1
        %s299 = sand.u32 %s140, 1
        %s300 = smul.addr %s299, 16
        %s301 = scalar_lea.vmem [#allocation7], %s300
        %p302 = pneg %p179
        %p303 = pneg %p176
        %s304 = sand.u32 %s166, 1
        %s305 = sand.u32 %s166, 1
        %s306 = smul.addr %s305, 16
        %s307 = scalar_lea.vmem [#allocation8], %s306
        %s308 = smul.u32 2, %s22
        %s309 = ssub.s32 3, %s308
        %p310 = scmp.lt.s32.totalorder %s309, 2
        %s311 = scalar_select %p310, %s309, 2
        %s312 = smul.u32 128, %s311
        %s313 = smul.u32 2, %s22
        %s314 = ssub.s32 3, %s313
        %p315 = scmp.lt.s32.totalorder %s314, 2
        %s316 = scalar_select %p315, %s314, 2
        %s317 = smul.u32 128, %s316
        %s318 = smul.u32 2, %s22
        %s319 = ssub.s32 3, %s318
        %p320 = scmp.lt.s32.totalorder %s319, 2
        %s321 = scalar_select %p320, %s319, 2
        %s322 = smul.u32 128, %s321
        %v323 = vld [vmem:[%s268] sm:$0xff]
        %v324 = vld [vmem:[%s268 + $0x8] sm:$0xff]
        %v325 = vlaneseq
        %v326 = vshrl.u32 %v325, 7
        %v327 = vadd.s32 %v326, 8
        %s328 = smul.u32 %s22, 16
        %v329 = vstv %s328
        %v330 = vadd.s32 %v326, %v329
        %v331 = vadd.s32 %v327, %v329
        %vm332 = vcmp.lt.s32.totalorder %v330, 24
        %vm333 = vcmp.lt.s32.totalorder %v331, 24
        %v334 = vsel %vm332, %v323, 0.0
        %v335 = vsel %vm333, %v324, 0.0
        %v336 = vld [vmem:[#allocation4] sm:$0xff]
        %v337 = vld [vmem:[#allocation4 + $0x8] sm:$0xff]
        %v338 = vld [vmem:[#allocation4 + $0x10] sm:$0xff]
        %v339 = vld [vmem:[#allocation4 + $0x18] sm:$0xff]
        %v340 = vld [vmem:[#allocation4 + $0x20] sm:$0xff]
        %v341 = vld [vmem:[#allocation4 + $0x28] sm:$0xff]
        %v342 = vld [vmem:[#allocation4 + $0x30] sm:$0xff]
        %v343 = vld [vmem:[#allocation4 + $0x38] sm:$0xff]
        %v344 = vld [vmem:[%s2] sm:$0x3]
        %v346 = vlaneseq
        %v347 = vshrl.u32 %v346, 7
        %v348 = vsub.s32 0, %v347
        %v349 = vrot.slane %v344, %v348
        %v350 = vlaneseq
        %v351 = vshrl.u32 %v350, 7
        %v352 = vsub.s32 1, %v351
        %v353 = vrot.slane %v344, %v352
        %vm356 = vcmask 261120
        %v358 = vsel %vm356, %v334, 0
        %v361 = vsel %vm356, %v335, 0
        %363 = vmatprep.subr.mxu0 0.0
        %364 = vmatpush1.msra.mxu0 0.0
        %365 = vmatprep.subr.mxu0 0.0
        %366 = vmatpush1.msra.mxu0 0.0
        %367 = vmatprep.subr.mxu0 0.0
        %368 = vmatpush1.msra.mxu0 0.0
        %369 = vmatprep.subr.mxu0 0.0
        %370 = vmatpush1.msra.mxu0 0.0
        %371 = vmatprep.subr.mxu0 0.0
        %372 = vmatpush1.msra.mxu0 0.0
        %373 = vmatprep.subr.mxu0 0.0
        %374 = vmatpush1.msra.mxu0 0.0
        %375 = vmatprep.subr.mxu0 0.0
        %376 = vmatpush1.msra.mxu0 0.0
        %377 = vmatprep.subr.mxu0 0.0
        %378 = vmatpush1.msra.mxu0 0.0
        %379 = vmatprep.subr.mxu0 0.0
        %380 = vmatpush1.msra.mxu0 0.0
        %381 = vmatprep.subr.mxu0 0.0
        %382 = vmatpush1.msra.mxu0 0.0
        %383 = vmatprep.subr.mxu0 0.0
        %384 = vmatpush1.msra.mxu0 0.0
        %385 = vmatprep.subr.mxu0 0.0
        %386 = vmatpush1.msra.mxu0 0.0
        %387 = vmatprep.subr.mxu0 %v343
        %388 = vmatpush1.msra.mxu0 %v342
        %389 = vmatprep.subr.mxu0 %v341
        %390 = vmatpush1.msra.mxu0 %v340
        %391 = vmatprep.subr.mxu0 %v339
        %392 = vmatpush1.msra.mxu0 %v338
        %393 = vmatprep.subr.mxu0 %v337
        %394 = vmatpush1.msra.mxu0 %v336
        %395 = vmatprep.subr.mxu0 0.0
        %396 = vmatpush2.msra.mxu0 0.0
        %397 = vmatprep.subr.mxu0 0.0
        %398 = vmatpush2.msra.mxu0 0.0
        %399 = vmatprep.subr.mxu0 0.0
        %400 = vmatpush2.msra.mxu0 0.0
        %401 = vmatprep.subr.mxu0 0.0
        %402 = vmatpush2.msra.mxu0 0.0
        %403 = vmatprep.subr.mxu0 0.0
        %404 = vmatpush2.msra.mxu0 0.0
        %405 = vmatprep.subr.mxu0 0.0
        %406 = vmatpush2.msra.mxu0 0.0
        %407 = vmatprep.subr.mxu0 0.0
        %408 = vmatpush2.msra.mxu0 0.0
        %409 = vmatprep.subr.mxu0 0.0
        %410 = vmatpush2.msra.mxu0 0.0
        %411 = vmatprep.subr.mxu0 0.0
        %412 = vmatpush2.msra.mxu0 0.0
        %413 = vmatprep.subr.mxu0 0.0
        %414 = vmatpush2.msra.mxu0 0.0
        %415 = vmatprep.subr.mxu0 0.0
        %416 = vmatpush2.msra.mxu0 0.0
        %417 = vmatprep.subr.mxu0 0.0
        %418 = vmatpush2.msra.mxu0 0.0
        %419 = vmatprep.subr.mxu0 0.0
        %420 = vmatpush2.msra.mxu0 0.0
        %421 = vmatprep.subr.mxu0 0.0
        %422 = vmatpush2.msra.mxu0 0.0
        %423 = vmatprep.subr.mxu0 0.0
        %424 = vmatpush2.msra.mxu0 0.0
        %425 = vmatprep.subr.mxu0 0.0
        %426 = vmatpush2.msra.mxu0 0.0
        %427 = vmatprep.mubr.f32.mxu0 0.0
        %428 = vmatmul.mubr.f32.gmra.mxu0 %v358
        %v429 = vpop.f32.mrf.mxu0
        %v430 = vadd.f32 %v349, %v429
        %v431 = vpop.f32.mrf.mxu0
        %v432 = vadd.f32 %v353, %v431
        %433 = vmatprep.mubr.f32.mxu0 0.0
        %434 = vmatmul.mubr.f32.gmra.mxu0 %v361
        %v435 = vpop.f32.mrf.mxu0
        %v436 = vadd.f32 %v349, %v435
        %v437 = vpop.f32.mrf.mxu0
        %v438 = vadd.f32 %v353, %v437
        %439 = vdwg.mxu0
        %v440 = vmax.f32 %v430, 0.0
        %v441 = vmax.f32 %v432, 0.0
        %v442 = vmax.f32 %v436, 0.0
        %v443 = vmax.f32 %v438, 0.0
        %v444 = vld [vmem:[#allocation6] sm:$0xff]
        %v445 = vld [vmem:[#allocation6 + $0x8] sm:$0xff]
        %v446 = vld [vmem:[#allocation6 + $0x10] sm:$0xff]
        %v447 = vld [vmem:[#allocation6 + $0x18] sm:$0xff]
        %v448 = vld [vmem:[#allocation6 + $0x20] sm:$0xff]
        %v449 = vld [vmem:[#allocation6 + $0x28] sm:$0xff]
        %v450 = vld [vmem:[#allocation6 + $0x30] sm:$0xff]
        %v451 = vld [vmem:[#allocation6 + $0x38] sm:$0xff]
        %v452 = vld [vmem:[#allocation6 + $0x40] sm:$0xff]
        %v453 = vld [vmem:[#allocation6 + $0x48] sm:$0xff]
        %v454 = vld [vmem:[#allocation6 + $0x50] sm:$0xff]
        %v455 = vld [vmem:[#allocation6 + $0x58] sm:$0xff]
        %v456 = vld [vmem:[#allocation6 + $0x60] sm:$0xff]
        %v457 = vld [vmem:[#allocation6 + $0x68] sm:$0xff]
        %v458 = vld [vmem:[#allocation6 + $0x70] sm:$0xff]
        %v459 = vld [vmem:[#allocation6 + $0x78] sm:$0xff]
        %v460 = vld [vmem:[#allocation6 + $0x80] sm:$0xff]
        %v461 = vld [vmem:[#allocation6 + $0x88] sm:$0xff]
        %v462 = vld [vmem:[#allocation6 + $0x90] sm:$0xff]
        %v463 = vld [vmem:[#allocation6 + $0x98] sm:$0xff]
        %v464 = vld [vmem:[#allocation6 + $0xa0] sm:$0xff]
        %v465 = vld [vmem:[#allocation6 + $0xa8] sm:$0xff]
        %v466 = vld [vmem:[#allocation6 + $0xb0] sm:$0xff]
        %v467 = vld [vmem:[#allocation6 + $0xb8] sm:$0xff]
        %v468 = vld [vmem:[#allocation6 + $0xc0] sm:$0xff]
        %v469 = vld [vmem:[#allocation6 + $0xc8] sm:$0xff]
        %v470 = vld [vmem:[#allocation6 + $0xd0] sm:$0xff]
        %v471 = vld [vmem:[#allocation6 + $0xd8] sm:$0xff]
        %v472 = vld [vmem:[#allocation6 + $0xe0] sm:$0xff]
        %v473 = vld [vmem:[#allocation6 + $0xe8] sm:$0xff]
        %v474 = vld [vmem:[#allocation6 + $0xf0] sm:$0xff]
        %v475 = vld [vmem:[#allocation6 + $0xf8] sm:$0xff]
        %v476 = vld [vmem:[%s4] sm:$0x1]
        %v478 = vlaneseq
        %v479 = vshrl.u32 %v478, 7
        %v480 = vsub.s32 0, %v479
        %v481 = vrot.slane %v476, %v480
        %483 = vmatprep.subr.mxu0 0.0
        %484 = vmatpush1.msra.mxu0 %v459
        %485 = vmatprep.subr.mxu0 0.0
        %486 = vmatpush1.msra.mxu0 %v458
        %487 = vmatprep.subr.mxu0 0.0
        %488 = vmatpush1.msra.mxu0 %v457
        %489 = vmatprep.subr.mxu0 0.0
        %490 = vmatpush1.msra.mxu0 %v456
        %491 = vmatprep.subr.mxu0 0.0
        %492 = vmatpush1.msra.mxu0 %v455
        %493 = vmatprep.subr.mxu0 0.0
        %494 = vmatpush1.msra.mxu0 %v454
        %495 = vmatprep.subr.mxu0 0.0
        %496 = vmatpush1.msra.mxu0 %v453
        %497 = vmatprep.subr.mxu0 0.0
        %498 = vmatpush1.msra.mxu0 %v452
        %499 = vmatprep.subr.mxu0 0.0
        %500 = vmatpush1.msra.mxu0 %v451
        %501 = vmatprep.subr.mxu0 0.0
        %502 = vmatpush1.msra.mxu0 %v450
        %503 = vmatprep.subr.mxu0 0.0
        %504 = vmatpush1.msra.mxu0 %v449
        %505 = vmatprep.subr.mxu0 0.0
        %506 = vmatpush1.msra.mxu0 %v448
        %507 = vmatprep.subr.mxu0 0.0
        %508 = vmatpush1.msra.mxu0 %v447
        %509 = vmatprep.subr.mxu0 0.0
        %510 = vmatpush1.msra.mxu0 %v446
        %511 = vmatprep.subr.mxu0 0.0
        %512 = vmatpush1.msra.mxu0 %v445
        %513 = vmatprep.subr.mxu0 0.0
        %514 = vmatpush1.msra.mxu0 %v444
        %515 = vmatprep.subr.mxu0 0.0
        %516 = vmatpush2.msra.mxu0 %v475
        %517 = vmatprep.subr.mxu0 0.0
        %518 = vmatpush2.msra.mxu0 %v474
        %519 = vmatprep.subr.mxu0 0.0
        %520 = vmatpush2.msra.mxu0 %v473
        %521 = vmatprep.subr.mxu0 0.0
        %522 = vmatpush2.msra.mxu0 %v472
        %523 = vmatprep.subr.mxu0 0.0
        %524 = vmatpush2.msra.mxu0 %v471
        %525 = vmatprep.subr.mxu0 0.0
        %526 = vmatpush2.msra.mxu0 %v470
        %527 = vmatprep.subr.mxu0 0.0
        %528 = vmatpush2.msra.mxu0 %v469
        %529 = vmatprep.subr.mxu0 0.0
        %530 = vmatpush2.msra.mxu0 %v468
        %531 = vmatprep.subr.mxu0 0.0
        %532 = vmatpush2.msra.mxu0 %v467
        %533 = vmatprep.subr.mxu0 0.0
        %534 = vmatpush2.msra.mxu0 %v466
        %535 = vmatprep.subr.mxu0 0.0
        %536 = vmatpush2.msra.mxu0 %v465
        %537 = vmatprep.subr.mxu0 0.0
        %538 = vmatpush2.msra.mxu0 %v464
        %539 = vmatprep.subr.mxu0 0.0
        %540 = vmatpush2.msra.mxu0 %v463
        %541 = vmatprep.subr.mxu0 0.0
        %542 = vmatpush2.msra.mxu0 %v462
        %543 = vmatprep.subr.mxu0 0.0
        %544 = vmatpush2.msra.mxu0 %v461
        %545 = vmatprep.subr.mxu0 0.0
        %546 = vmatpush2.msra.mxu0 %v460
        %547 = vmatprep.mubr.f32.mxu0 %v441
        %548 = vmatmul.mubr.f32.gmra.mxu0 %v440
        %v549 = vpop.f32.mrf.mxu0
        %v550 = vadd.f32 %v481, %v549
        %v551 = vpop.f32.mrf.mxu0
        %552 = vmatprep.mubr.f32.mxu0 %v443
        %553 = vmatmul.mubr.f32.gmra.mxu0 %v442
        %v554 = vpop.f32.mrf.mxu0
        %v555 = vadd.f32 %v481, %v554
        %v556 = vpop.f32.mrf.mxu0
        %557 = vdwg.mxu0
        %558 = vmax.xlane.f32.xlu0 %v550
        %v559 = vpop.xlane.xlu0 %558
        %560 = vmax.xlane.f32.xlu0 %v555
        %v561 = vpop.xlane.xlu0 %560
        %v562 = vsub.f32 %v550, %v559
        %v563 = vsub.f32 %v555, %v561
        %v564 = vmul.f32 %v562, 1.442695
        %v565 = vpow.pop %v564
        %v566 = vmul.f32 %v563, 1.442695
        %v567 = vpow.pop %v566
        %568 = vadd.xlane.f32.xlu0 %v565
        %v569 = vpop.xlane.xlu0 %568
        %570 = vadd.xlane.f32.xlu0 %v567
        %v571 = vpop.xlane.xlu0 %570
        %v572 = vlog2.pop %v569
        %v573 = vmul.f32 %v572, 0.6931472
        %v574 = vlog2.pop %v571
        %v575 = vmul.f32 %v574, 0.6931472
        %v576 = vadd.f32 %v559, %v573
        %v577 = vadd.f32 %v561, %v575
        %vm578 = vcmask 15360
        %579 = vst.msk [vmem:[%s301] sm:$0xff] %vm578, %v550
        %580 = vst.msk [vmem:[%s301 + $0x8] sm:$0xff] %vm578, %v555
        %v581 = vsub.f32 %v550, %v576
        %v582 = vsub.f32 %v555, %v577
        %583 = vst.msk [vmem:[%s307] sm:$0xff] %vm578, %v581
        %584 = vst.msk [vmem:[%s307 + $0x8] sm:$0xff] %vm578, %v582
        %s585 = sand.u32 %s140, 1
        %s586 = sand.u32 %s140, 1
        %s587 = smul.addr %s586, 16
        %s588 = scalar_lea.vmem [#allocation7], %s587
        %s589 = sand.u32 %s166, 1
        %s590 = sand.u32 %s166, 1
        %s591 = smul.addr %s590, 16
        %s592 = scalar_lea.vmem [#allocation8], %s591
        // Predicated region
        $region53: #{tpu_custom_call.1} parent=39 // pred_check
          %p593 = pneg %p150
        $region54: #{tpu_custom_call.1} parent=39 // pred_check_branch
          %595 = sbr.rel (%p593) target = $region56
        $region55: #{tpu_custom_call.1} parent=39 // pred_region
          %s596 = smul.u32 2, %s22
          %s597 = ssub.s32 3, %s596
          %p598 = scmp.lt.s32.totalorder %s597, 2
          %s599 = scalar_select %p598, %s597, 2
          %s600 = smul.u32 128, %s599
          %p601 = scmp.ne.s32.totalorder 0, %s600
          %s602 = smul.addr %s596, 8
          %s603 = scalar_lea.vmem %s5, %s602
          // Predicated region
          $region57: #{tpu_custom_call.1} parent=55 // pred_check
            %p604 = pneg %p601
          $region58: #{tpu_custom_call.1} parent=55 // pred_check_branch
            %606 = sbr.rel (%p604) target = $region60
          $region59: #{tpu_custom_call.1} parent=55 // pred_region
            // Predicated region
            $region61: #{tpu_custom_call.1} parent=59 // pred_check
              _
            $region62: #{tpu_custom_call.1} parent=59 // pred_check_branch
              %608 = sbr.rel (0) target = $region64
            $region63: #{tpu_custom_call.1} parent=59 // pred_region
              // Predicated region
              $region83: #{tpu_custom_call.1} parent=63 // pred_check
                _
              $region84: #{tpu_custom_call.1} parent=63 // pred_check_branch
                %660 = sbr.rel (0) target = $region86
              $region85: #{tpu_custom_call.1} parent=63 // pred_region
                %s661 = sshrl.u32 %s599, 1
                // While loop
                $region87: #{tpu_custom_call.1} parent=85 // loop_pre_header
                  _
                $region88: #{tpu_custom_call.1} parent=85 // loop_header
                  %s663 = sphi 0, %s665
                  %p664 = scmp.ge.s32.totalorder %s663, %s661
                  %s668 = sphi 0, %s677
                  %s669 = sphi %s588, %s680
                  %s670 = sphi %s603, %s681
                $region89: #{tpu_custom_call.1} parent=85 // loop_header_branch
                  %667 = sbr.rel (%p664) target = $region93
                $region90: #{tpu_custom_call.1} parent=85 // loop_body
                  %v671 = vld [vmem:[%s669] sm:$0xff]
                  %672 = vst [vmem:[%s670] sm:$0xff] %v671
                  %v673 = vld [vmem:[%s669 + $0x8] sm:$0xff]
                  %674 = vst [vmem:[%s670 + $0x8] sm:$0xff] %v673
                  %s675 = sadd.s32 1, %s668
                  %p676 = scmp.ge.s32.totalorder %s675, %s661
                  %s677 = scalar_select %p676, 0, %s675
                  %s678 = smul.u32 %s677, 16
                  %s679 = smul.u32 %s677, 16
                  %s680 = scalar_lea.vmem %s588, %s678 [#allocation7]
                  %s681 = scalar_lea.vmem %s603, %s679
                $region91: #{tpu_custom_call.1} parent=85 // loop_footer
                  %s665 = sadd.s32 %s663, 1
                $region92: #{tpu_custom_call.1} parent=85 // loop_footer_branch
                  %662 = sbr.rel target = $region88
                $region93: #{tpu_custom_call.1} parent=85 // loop_exit
                  _
                %s682 = sshrl.u32 %s599, 1
                %s683 = sand.u32 %s599, 1
                %s684 = smul.u32 %s682, 2
                %s685 = smul.u32 8, %s684
                %s686 = scalar_lea.vmem %s588, %s685 [#allocation7]
                %s687 = smul.u32 8, %s684
                %s688 = scalar_lea.vmem %s603, %s687
                // While loop
                $region94: #{tpu_custom_call.1} parent=85 // loop_pre_header
                  _
                $region95: #{tpu_custom_call.1} parent=85 // loop_header
                  %s690 = sphi 0, %s692
                  %p691 = scmp.ge.s32.totalorder %s690, %s683
                  %s695 = sphi 0, %s702
                  %s696 = sphi %s686, %s705
                  %s697 = sphi %s688, %s706
                $region96: #{tpu_custom_call.1} parent=85 // loop_header_branch
                  %694 = sbr.rel (%p691) target = $region100
                $region97: #{tpu_custom_call.1} parent=85 // loop_body
                  %v698 = vld [vmem:[%s696] sm:$0xff]
                  %699 = vst [vmem:[%s697] sm:$0xff] %v698
                  %s700 = sadd.s32 1, %s695
                  %p701 = scmp.ge.s32.totalorder %s700, %s683
                  %s702 = scalar_select %p701, 0, %s700
                  %s703 = smul.u32 %s702, 8
                  %s704 = smul.u32 %s702, 8
                  %s705 = scalar_lea.vmem %s686, %s703 [#allocation7]
                  %s706 = scalar_lea.vmem %s688, %s704
                $region98: #{tpu_custom_call.1} parent=85 // loop_footer
                  %s692 = sadd.s32 %s690, 1
                $region99: #{tpu_custom_call.1} parent=85 // loop_footer_branch
                  %689 = sbr.rel target = $region95
                $region100: #{tpu_custom_call.1} parent=85 // loop_exit
                  _
              $region86: #{tpu_custom_call.1} parent=63 // pred_fallthru
                _
              // Predicated region
              $region101: #{tpu_custom_call.1} parent=63 // pred_check
                _
              $region102: #{tpu_custom_call.1} parent=63 // pred_check_branch
                %708 = sbr.rel target = $region104
              $region103: #{tpu_custom_call.1} parent=63 // pred_region
                _
              $region104: #{tpu_custom_call.1} parent=63 // pred_fallthru
                _
            $region64: #{tpu_custom_call.1} parent=59 // pred_fallthru
              _
            // Predicated region
            $region65: #{tpu_custom_call.1} parent=59 // pred_check
              _
            $region66: #{tpu_custom_call.1} parent=59 // pred_check_branch
              %610 = sbr.rel target = $region68
            $region67: #{tpu_custom_call.1} parent=59 // pred_region
              %s612 = ssub.s32 256, 1
              %s613 = sshrl.u32 %s599, 1
              // While loop
              $region69: #{tpu_custom_call.1} parent=67 // loop_pre_header
                _
              $region70: #{tpu_custom_call.1} parent=67 // loop_header
                %s615 = sphi 0, %s617
                %p616 = scmp.ge.s32.totalorder %s615, %s613
                %s620 = sphi 0, %s629
                %s621 = sphi %s588, %s632
                %s622 = sphi %s603, %s633
              $region71: #{tpu_custom_call.1} parent=67 // loop_header_branch
                %619 = sbr.rel (%p616) target = $region75
              $region72: #{tpu_custom_call.1} parent=67 // loop_body
                %v623 = vld [vmem:[%s621] sm:%s612]
                %624 = vst [vmem:[%s622] sm:%s612] %v623
                %v625 = vld [vmem:[%s621 + $0x8] sm:%s612]
                %626 = vst [vmem:[%s622 + $0x8] sm:%s612] %v625
                %s627 = sadd.s32 1, %s620
                %p628 = scmp.ge.s32.totalorder %s627, %s613
                %s629 = scalar_select %p628, 0, %s627
                %s630 = smul.u32 %s629, 16
                %s631 = smul.u32 %s629, 16
                %s632 = scalar_lea.vmem %s588, %s630 [#allocation7]
                %s633 = scalar_lea.vmem %s603, %s631
              $region73: #{tpu_custom_call.1} parent=67 // loop_footer
                %s617 = sadd.s32 %s615, 1
              $region74: #{tpu_custom_call.1} parent=67 // loop_footer_branch
                %614 = sbr.rel target = $region70
              $region75: #{tpu_custom_call.1} parent=67 // loop_exit
                _
              %s634 = sshrl.u32 %s599, 1
              %s635 = sand.u32 %s599, 1
              %s636 = smul.u32 %s634, 2
              %s637 = smul.u32 8, %s636
              %s638 = scalar_lea.vmem %s588, %s637 [#allocation7]
              %s639 = smul.u32 8, %s636
              %s640 = scalar_lea.vmem %s603, %s639
              // While loop
              $region76: #{tpu_custom_call.1} parent=67 // loop_pre_header
                _
              $region77: #{tpu_custom_call.1} parent=67 // loop_header
                %s642 = sphi 0, %s644
                %p643 = scmp.ge.s32.totalorder %s642, %s635
                %s647 = sphi 0, %s654
                %s648 = sphi %s638, %s657
                %s649 = sphi %s640, %s658
              $region78: #{tpu_custom_call.1} parent=67 // loop_header_branch
                %646 = sbr.rel (%p643) target = $region82
              $region79: #{tpu_custom_call.1} parent=67 // loop_body
                %v650 = vld [vmem:[%s648] sm:%s612]
                %651 = vst [vmem:[%s649] sm:%s612] %v650
                %s652 = sadd.s32 1, %s647
                %p653 = scmp.ge.s32.totalorder %s652, %s635
                %s654 = scalar_select %p653, 0, %s652
                %s655 = smul.u32 %s654, 8
                %s656 = smul.u32 %s654, 8
                %s657 = scalar_lea.vmem %s638, %s655 [#allocation7]
                %s658 = scalar_lea.vmem %s640, %s656
              $region80: #{tpu_custom_call.1} parent=67 // loop_footer
                %s644 = sadd.s32 %s642, 1
              $region81: #{tpu_custom_call.1} parent=67 // loop_footer_branch
                %641 = sbr.rel target = $region77
              $region82: #{tpu_custom_call.1} parent=67 // loop_exit
                _
            $region68: #{tpu_custom_call.1} parent=59 // pred_fallthru
              _
          $region60: #{tpu_custom_call.1} parent=55 // pred_fallthru
            _
          %709 = vnop
        $region56: #{tpu_custom_call.1} parent=39 // pred_fallthru
          _
        // Predicated region
        $region105: #{tpu_custom_call.1} parent=39 // pred_check
          %p710 = pneg %p176
        $region106: #{tpu_custom_call.1} parent=39 // pred_check_branch
          %712 = sbr.rel (%p710) target = $region108
        $region107: #{tpu_custom_call.1} parent=39 // pred_region
          %s713 = smul.u32 2, %s22
          %s714 = ssub.s32 3, %s713
          %p715 = scmp.lt.s32.totalorder %s714, 2
          %s716 = scalar_select %p715, %s714, 2
          %s717 = smul.u32 128, %s716
          %p718 = scmp.ne.s32.totalorder 0, %s717
          %s719 = smul.addr %s713, 8
          %s720 = scalar_lea.vmem %s6, %s719
          // Predicated region
          $region109: #{tpu_custom_call.1} parent=107 // pred_check
            %p721 = pneg %p718
          $region110: #{tpu_custom_call.1} parent=107 // pred_check_branch
            %723 = sbr.rel (%p721) target = $region112
          $region111: #{tpu_custom_call.1} parent=107 // pred_region
            // Predicated region
            $region113: #{tpu_custom_call.1} parent=111 // pred_check
              _
            $region114: #{tpu_custom_call.1} parent=111 // pred_check_branch
              %725 = sbr.rel (0) target = $region116
            $region115: #{tpu_custom_call.1} parent=111 // pred_region
              // Predicated region
              $region135: #{tpu_custom_call.1} parent=115 // pred_check
                _
              $region136: #{tpu_custom_call.1} parent=115 // pred_check_branch
                %777 = sbr.rel (0) target = $region138
              $region137: #{tpu_custom_call.1} parent=115 // pred_region
                %s778 = sshrl.u32 %s716, 1
                // While loop
                $region139: #{tpu_custom_call.1} parent=137 // loop_pre_header
                  _
                $region140: #{tpu_custom_call.1} parent=137 // loop_header
                  %s780 = sphi 0, %s782
                  %p781 = scmp.ge.s32.totalorder %s780, %s778
                  %s785 = sphi 0, %s794
                  %s786 = sphi %s592, %s797
                  %s787 = sphi %s720, %s798
                $region141: #{tpu_custom_call.1} parent=137 // loop_header_branch
                  %784 = sbr.rel (%p781) target = $region145
                $region142: #{tpu_custom_call.1} parent=137 // loop_body
                  %v788 = vld [vmem:[%s786] sm:$0xff]
                  %789 = vst [vmem:[%s787] sm:$0xff] %v788
                  %v790 = vld [vmem:[%s786 + $0x8] sm:$0xff]
                  %791 = vst [vmem:[%s787 + $0x8] sm:$0xff] %v790
                  %s792 = sadd.s32 1, %s785
                  %p793 = scmp.ge.s32.totalorder %s792, %s778
                  %s794 = scalar_select %p793, 0, %s792
                  %s795 = smul.u32 %s794, 16
                  %s796 = smul.u32 %s794, 16
                  %s797 = scalar_lea.vmem %s592, %s795 [#allocation8]
                  %s798 = scalar_lea.vmem %s720, %s796
                $region143: #{tpu_custom_call.1} parent=137 // loop_footer
                  %s782 = sadd.s32 %s780, 1
                $region144: #{tpu_custom_call.1} parent=137 // loop_footer_branch
                  %779 = sbr.rel target = $region140
                $region145: #{tpu_custom_call.1} parent=137 // loop_exit
                  _
                %s799 = sshrl.u32 %s716, 1
                %s800 = sand.u32 %s716, 1
                %s801 = smul.u32 %s799, 2
                %s802 = smul.u32 8, %s801
                %s803 = scalar_lea.vmem %s592, %s802 [#allocation8]
                %s804 = smul.u32 8, %s801
                %s805 = scalar_lea.vmem %s720, %s804
                // While loop
                $region146: #{tpu_custom_call.1} parent=137 // loop_pre_header
                  _
                $region147: #{tpu_custom_call.1} parent=137 // loop_header
                  %s807 = sphi 0, %s809
                  %p808 = scmp.ge.s32.totalorder %s807, %s800
                  %s812 = sphi 0, %s819
                  %s813 = sphi %s803, %s822
                  %s814 = sphi %s805, %s823
                $region148: #{tpu_custom_call.1} parent=137 // loop_header_branch
                  %811 = sbr.rel (%p808) target = $region152
                $region149: #{tpu_custom_call.1} parent=137 // loop_body
                  %v815 = vld [vmem:[%s813] sm:$0xff]
                  %816 = vst [vmem:[%s814] sm:$0xff] %v815
                  %s817 = sadd.s32 1, %s812
                  %p818 = scmp.ge.s32.totalorder %s817, %s800
                  %s819 = scalar_select %p818, 0, %s817
                  %s820 = smul.u32 %s819, 8
                  %s821 = smul.u32 %s819, 8
                  %s822 = scalar_lea.vmem %s803, %s820 [#allocation8]
                  %s823 = scalar_lea.vmem %s805, %s821
                $region150: #{tpu_custom_call.1} parent=137 // loop_footer
                  %s809 = sadd.s32 %s807, 1
                $region151: #{tpu_custom_call.1} parent=137 // loop_footer_branch
                  %806 = sbr.rel target = $region147
                $region152: #{tpu_custom_call.1} parent=137 // loop_exit
                  _
              $region138: #{tpu_custom_call.1} parent=115 // pred_fallthru
                _
              // Predicated region
              $region153: #{tpu_custom_call.1} parent=115 // pred_check
                _
              $region154: #{tpu_custom_call.1} parent=115 // pred_check_branch
                %825 = sbr.rel target = $region156
              $region155: #{tpu_custom_call.1} parent=115 // pred_region
                _
              $region156: #{tpu_custom_call.1} parent=115 // pred_fallthru
                _
            $region116: #{tpu_custom_call.1} parent=111 // pred_fallthru
              _
            // Predicated region
            $region117: #{tpu_custom_call.1} parent=111 // pred_check
              _
            $region118: #{tpu_custom_call.1} parent=111 // pred_check_branch
              %727 = sbr.rel target = $region120
            $region119: #{tpu_custom_call.1} parent=111 // pred_region
              %s729 = ssub.s32 256, 1
              %s730 = sshrl.u32 %s716, 1
              // While loop
              $region121: #{tpu_custom_call.1} parent=119 // loop_pre_header
                _
              $region122: #{tpu_custom_call.1} parent=119 // loop_header
                %s732 = sphi 0, %s734
                %p733 = scmp.ge.s32.totalorder %s732, %s730
                %s737 = sphi 0, %s746
                %s738 = sphi %s592, %s749
                %s739 = sphi %s720, %s750
              $region123: #{tpu_custom_call.1} parent=119 // loop_header_branch
                %736 = sbr.rel (%p733) target = $region127
              $region124: #{tpu_custom_call.1} parent=119 // loop_body
                %v740 = vld [vmem:[%s738] sm:%s729]
                %741 = vst [vmem:[%s739] sm:%s729] %v740
                %v742 = vld [vmem:[%s738 + $0x8] sm:%s729]
                %743 = vst [vmem:[%s739 + $0x8] sm:%s729] %v742
                %s744 = sadd.s32 1, %s737
                %p745 = scmp.ge.s32.totalorder %s744, %s730
                %s746 = scalar_select %p745, 0, %s744
                %s747 = smul.u32 %s746, 16
                %s748 = smul.u32 %s746, 16
                %s749 = scalar_lea.vmem %s592, %s747 [#allocation8]
                %s750 = scalar_lea.vmem %s720, %s748
              $region125: #{tpu_custom_call.1} parent=119 // loop_footer
                %s734 = sadd.s32 %s732, 1
              $region126: #{tpu_custom_call.1} parent=119 // loop_footer_branch
                %731 = sbr.rel target = $region122
              $region127: #{tpu_custom_call.1} parent=119 // loop_exit
                _
              %s751 = sshrl.u32 %s716, 1
              %s752 = sand.u32 %s716, 1
              %s753 = smul.u32 %s751, 2
              %s754 = smul.u32 8, %s753
              %s755 = scalar_lea.vmem %s592, %s754 [#allocation8]
              %s756 = smul.u32 8, %s753
              %s757 = scalar_lea.vmem %s720, %s756
              // While loop
              $region128: #{tpu_custom_call.1} parent=119 // loop_pre_header
                _
              $region129: #{tpu_custom_call.1} parent=119 // loop_header
                %s759 = sphi 0, %s761
                %p760 = scmp.ge.s32.totalorder %s759, %s752
                %s764 = sphi 0, %s771
                %s765 = sphi %s755, %s774
                %s766 = sphi %s757, %s775
              $region130: #{tpu_custom_call.1} parent=119 // loop_header_branch
                %763 = sbr.rel (%p760) target = $region134
              $region131: #{tpu_custom_call.1} parent=119 // loop_body
                %v767 = vld [vmem:[%s765] sm:%s729]
                %768 = vst [vmem:[%s766] sm:%s729] %v767
                %s769 = sadd.s32 1, %s764
                %p770 = scmp.ge.s32.totalorder %s769, %s752
                %s771 = scalar_select %p770, 0, %s769
                %s772 = smul.u32 %s771, 8
                %s773 = smul.u32 %s771, 8
                %s774 = scalar_lea.vmem %s755, %s772 [#allocation8]
                %s775 = scalar_lea.vmem %s757, %s773
              $region132: #{tpu_custom_call.1} parent=119 // loop_footer
                %s761 = sadd.s32 %s759, 1
              $region133: #{tpu_custom_call.1} parent=119 // loop_footer_branch
                %758 = sbr.rel target = $region129
              $region134: #{tpu_custom_call.1} parent=119 // loop_exit
                _
            $region120: #{tpu_custom_call.1} parent=111 // pred_fallthru
              _
          $region112: #{tpu_custom_call.1} parent=107 // pred_fallthru
            _
          %826 = vnop
        $region108: #{tpu_custom_call.1} parent=39 // pred_fallthru
          _
      $region40: #{tpu_custom_call.1} parent=5 // pred_fallthru
        _
      %p827 = scmp.le.s32.totalorder 2, %s17
      // Predicated region
      $region157: #{tpu_custom_call.1} parent=5 // pred_check
        %p828 = pneg %p827
      $region158: #{tpu_custom_call.1} parent=5 // pred_check_branch
        %830 = sbr.rel (%p828) target = $region160
      $region159: #{tpu_custom_call.1} parent=5 // pred_region
        %s831 = ssub.s32 %s17, 2
        // Predicated region
        $region161: #{tpu_custom_call.1} parent=159 // pred_check
          %p832 = pneg %p156
        $region162: #{tpu_custom_call.1} parent=159 // pred_check_branch
          %834 = sbr.rel (%p832) target = $region164
        $region163: #{tpu_custom_call.1} parent=159 // pred_region
          %s835 = sand.u32 %s141, 1
          %s836 = sand.u32 %s141, 1
          %s837 = smul.addr %s836, 16
          %s838 = scalar_lea.vmem [#allocation7], %s837
        $region164: #{tpu_custom_call.1} parent=159 // pred_fallthru
          _
        // Predicated region
        $region165: #{tpu_custom_call.1} parent=159 // pred_check
          %p839 = pneg %p182
        $region166: #{tpu_custom_call.1} parent=159 // pred_check_branch
          %841 = sbr.rel (%p839) target = $region168
        $region167: #{tpu_custom_call.1} parent=159 // pred_region
          %s842 = sand.u32 %s167, 1
          %s843 = sand.u32 %s167, 1
          %s844 = smul.addr %s843, 16
          %s845 = scalar_lea.vmem [#allocation8], %s844
        $region168: #{tpu_custom_call.1} parent=159 // pred_fallthru
          _
      $region160: #{tpu_custom_call.1} parent=5 // pred_fallthru
        _
    $region6: #{tpu_custom_call.1} parent=1 // loop_footer
      %s21 = sadd.s32 1, %s17
    $region7: #{tpu_custom_call.1} parent=1 // loop_footer_branch
      %16 = sbr.rel target = $region3
    $region8: #{tpu_custom_call.1} parent=1 // loop_exit
      _
    %846 = vsyncpa [#allocation3], 1
    %s847 = scalar_lea.sflag [#allocation3], 1
    %848 = vsyncpa %s847, 1
    %849 = vsyncpa [#allocation5], 1

</llo_original>
